<compile_context>
chip_gen: v5e
topology: v5e:2x2
jax: 0.10.0
libtpu: 0.0.40
codegen_flags: <defaults>
</compile_context>

<pallas_src>
import functools

import numpy as np

import jax
import jax.numpy as jnp
from jax import lax
from jax.experimental import pallas as pl
from jax.experimental.pallas import tpu as pltpu

EPS2 = 0.001 ** 2  # robust_l1(x) = sqrt(x^2 + 0.001^2)


def _round_up(x, m):
    return (x + m - 1) // m * m


def _interp_matrix_np(out_size, in_size):
    """Row-interpolation matrix matching F.interpolate bilinear, align_corners=False."""
    scale = in_size / out_size
    dst = np.arange(out_size, dtype=np.float64)
    src = np.maximum((dst + 0.5) * scale - 0.5, 0.0)   # PyTorch clamps negative src to 0
    i0 = np.minimum(np.floor(src).astype(np.int64), in_size - 1)
    i1 = np.minimum(i0 + 1, in_size - 1)
    w1 = np.clip(src - i0, 0.0, 1.0)
    w0 = 1.0 - w1
    rows = np.arange(out_size)
    mat = np.zeros((out_size, in_size), np.float32)
    mat[rows, i0] += w0.astype(np.float32)
    mat[rows, i1] += w1.astype(np.float32)
    return mat


def _fused_kernel(wh_ref, tgt_ref, bcol_ref, flow_ref, cmask_ref, out_ref):
    """All pyramid levels in one pass.

    2 MXU matmuls + 1 element-wise robust-L1 pass + 1 reduction + 1 SMEM store.
    Off-diagonal (cross-level) blocks and the row/lane padding produce garbage in
    `resized`; the coefficient mask (0 there) removes them from the reduction.
    """
    # Stage 1: row interpolation for every level at once (bf16 in, f32 acc).
    tmp = jnp.dot(wh_ref[...], tgt_ref[...], preferred_element_type=jnp.float32)
    # Stage 2: column interpolation, block-diag over the N*C planes and all
    # levels concatenated on the lane axis (kept in f32: no bf16 re-round of tmp).
    resized = jnp.dot(tmp, bcol_ref[...], preferred_element_type=jnp.float32)
    diff = resized - flow_ref[...]
    v = diff * diff + EPS2                       # v >= EPS2 > 0 everywhere
    robust = v * lax.rsqrt(v)                    # = sqrt(v); rsqrt runs on the EUP
    # Per-element coefficients (level_weight[/numel]) + masking, one cross-lane
    # reduction, and a single scalar store (no VMEM accumulator RMW).
    out_ref[0, 0] = jnp.sum(robust * cmask_ref[...])


@functools.partial(jax.jit, static_argnames=("coefs",))
def _fused_pyramid_loss(tgt_flow, *level_flows, coefs):
    """sum_l coef_l * sum(robust_l1(resize(tgt_flow, size_l) - flow_l))."""
    N, C, Hi, Wi = tgt_flow.shape
    NC = N * C

    # TODO(synk): at production resolutions replace this wrapper transpose and the
    # kron block-diagonal column matrix with a grid over the N*C planes
    # (BlockSpec index_map picks the plane, dimension_semantics=("parallel",...))
    # so HBM traffic is a single pass, VMEM stays linear in N*C (v7x has only
    # 64 MiB/TC) and v7x's second TensorCore is used; also consider bf16 flow DMA
    # there if the tolerance allows. At this toy size everything fits in <200 KiB
    # of VMEM so a gridless single invocation is the cheapest structure.
    tgt2d = jnp.transpose(tgt_flow, (2, 0, 1, 3)).reshape(Hi, NC * Wi)

    ho = [int(f.shape[2]) for f in level_flows]
    wo = [int(f.shape[3]) for f in level_flows]
    row_off, col_off = [], []
    r = c = 0
    for h, w in zip(ho, wo):
        row_off.append(r)
        col_off.append(c)
        r += h
        c += NC * w
    R = _round_up(r, 8)        # sublane multiple for the fused f32 slabs
    CC = _round_up(c, 128)     # lane multiple -> unmasked, lane-dense vector ops

    # Compile-time constants: fused interp matrices + per-element coefficient mask.
    wh_all = np.zeros((R, Hi), np.float32)
    bcol_all = np.zeros((NC * Wi, CC), np.float32)
    cmask = np.zeros((R, CC), np.float32)
    eye = np.eye(NC, dtype=np.float32)
    flow_all = jnp.zeros((R, CC), jnp.float32)
    for li, flow in enumerate(level_flows):
        h, w, r0, c0 = ho[li], wo[li], row_off[li], col_off[li]
        wh_all[r0:r0 + h, :] = _interp_matrix_np(h, Hi)
        bcol_all[:, c0:c0 + NC * w] = np.kron(eye, _interp_matrix_np(w, Wi).T)
        cmask[r0:r0 + h, c0:c0 + NC * w] = coefs[li]
        flow2d = jnp.transpose(flow, (2, 0, 1, 3)).reshape(h, NC * w)
        flow_all = lax.dynamic_update_slice(
            flow_all, flow2d.astype(jnp.float32), (r0, c0))

    vmem = pl.BlockSpec(memory_space=pltpu.MemorySpace.VMEM)
    smem = pl.BlockSpec(memory_space=pltpu.MemorySpace.SMEM)
    out = pl.pallas_call(
        _fused_kernel,
        out_shape=jax.ShapeDtypeStruct((1, 1), jnp.float32),
        in_specs=[vmem] * 5,
        out_specs=smem,                       # scalar result lives in SMEM
    )(
        # Bilinear weights are exact 0.5s in bf16 for these power-of-two resizes.
        jnp.asarray(wh_all, jnp.bfloat16),
        tgt2d.astype(jnp.bfloat16),
        jnp.asarray(bcol_all, jnp.float32),
        flow_all,
        jnp.asarray(cmask, jnp.float32),
    )
    return out[0, 0]


class PyramidDistillationLoss:
    """JAX/Pallas forward-only port of the PyTorch PyramidDistillationLoss."""

    def __init__(self, tgt_level='level2', level_weight=None,
                 reduction='mean', loss_weight=1.0):
        if level_weight is None:
            level_weight = dict(level3=1.0, level4=1.0, level5=1.0, level6=1.0)
        self.tgt_level = tgt_level
        self.level_weight = level_weight
        self.reduction = reduction
        self.loss_weight = loss_weight

    def __call__(self, multi_level_flow, avg_factor=None, weight=None,
                 reduction_override=None):
        assert reduction_override in (None, 'mean', 'sum')
        reduction = reduction_override if reduction_override else self.reduction
        if avg_factor is not None:
            assert reduction == 'mean'
        # TODO(synk): per-pixel `weight` map (resized per level) not implemented;
        # only the weight=None path of the reference module is covered.
        assert weight is None

        levels = [lvl for lvl in multi_level_flow if lvl != self.tgt_level]
        if not levels:
            return jnp.asarray(0.0, jnp.float32) * self.loss_weight

        coefs, flows = [], []
        for lvl in levels:
            flow = multi_level_flow[lvl]
            c = float(self.level_weight[lvl])
            if avg_factor is None and reduction == 'mean':
                c /= float(flow.size)          # 'mean' divisor baked into the coef
            coefs.append(c)
            flows.append(flow)

        total = _fused_pyramid_loss(multi_level_flow[self.tgt_level], *flows,
                                    coefs=tuple(coefs))
        if avg_factor is not None:
            total = total / avg_factor
        return total * self.loss_weight


# ---------------------------------------------------------------------------
# Pure-JAX references for the self-check (default 'mean', avg_factor=None).
# ---------------------------------------------------------------------------
def _reference_loss_matched(multi_level_flow, loss_fn):
    """Mirrors the kernel numerics (bf16 tgt + bf16 row weights, f32 everywhere else)."""
    tgt = multi_level_flow[loss_fn.tgt_level]
    _, _, Hi, Wi = tgt.shape
    tgt_b = tgt.astype(jnp.bfloat16).astype(jnp.float32)
    total = 0.0
    for lvl, flw in multi_level_flow.items():
        if lvl == loss_fn.tgt_level:
            continue
        Ho, Wo = flw.shape[-2:]
        wh = jnp.asarray(_interp_matrix_np(Ho, Hi), jnp.bfloat16).astype(jnp.float32)
        ww = jnp.asarray(_interp_matrix_np(Wo, Wi), jnp.float32)
        resized = jnp.einsum('oh,nchw,pw->ncop', wh, tgt_b, ww)
        diff = resized - flw.astype(jnp.float32)
        s = jnp.sum(jnp.sqrt(diff * diff + EPS2))
        total = total + s * loss_fn.level_weight[lvl] / flw.size
    return total * loss_fn.loss_weight


def _reference_loss_f32(multi_level_flow, loss_fn):
    """Full-f32, PyTorch-faithful reference of the original math."""
    tgt = multi_level_flow[loss_fn.tgt_level].astype(jnp.float32)
    _, _, Hi, Wi = tgt.shape
    total = 0.0
    for lvl, flw in multi_level_flow.items():
        if lvl == loss_fn.tgt_level:
            continue
        Ho, Wo = flw.shape[-2:]
        wh = jnp.asarray(_interp_matrix_np(Ho, Hi))
        ww = jnp.asarray(_interp_matrix_np(Wo, Wi))
        resized = jnp.einsum('oh,nchw,pw->ncop', wh, tgt, ww)
        diff = resized - flw.astype(jnp.float32)
        s = jnp.sum(jnp.sqrt(diff * diff + EPS2))
        total = total + s * loss_fn.level_weight[lvl] / flw.size
    return total * loss_fn.loss_weight


if __name__ == "__main__":
    key = jax.random.PRNGKey(0)
    shapes = dict(level2=(2, 2, 32, 32), level3=(2, 2, 16, 16),
                  level4=(2, 2, 8, 8), level5=(2, 2, 4, 4), level6=(2, 2, 2, 2))
    multi_level_flow = {}
    for name, shp in shapes.items():
        key, sub = jax.random.split(key)
        multi_level_flow[name] = jax.random.normal(sub, shp, dtype=jnp.float32)

    loss_fn = PyramidDistillationLoss()
    loss = jax.block_until_ready(loss_fn(multi_level_flow))

    # 1) Numerics-matched reference (same bf16 operands as the kernel) -> tight tol.
    ref_matched = _reference_loss_matched(multi_level_flow, loss_fn)
    # 2) Full-f32 PyTorch-faithful reference -> loose tol (kernel tgt is bf16).
    ref_f32 = _reference_loss_f32(multi_level_flow, loss_fn)

    assert jnp.isfinite(loss), loss
    assert jnp.allclose(loss, ref_matched, rtol=1e-3, atol=1e-4), (loss, ref_matched)
    assert jnp.allclose(loss, ref_f32, rtol=1e-2, atol=1e-3), (loss, ref_f32)

    print("KERNEL_OK")
</pallas_src>

<mosaic_0001>
module attributes {stable_mosaic.version = 11 : i64} {
  func.func @_fused_kernel(%arg0: memref<32x32xbf16, #tpu.memory_space<vmem>>, %arg1: memref<32x128xbf16, #tpu.memory_space<vmem>>, %arg2: memref<128x128xf32, #tpu.memory_space<vmem>>, %arg3: memref<32x128xf32, #tpu.memory_space<vmem>>, %arg4: memref<32x128xf32, #tpu.memory_space<vmem>>, %arg5: memref<1x1xf32, #tpu.memory_space<smem>>) attributes {dimension_semantics = [], scalar_prefetch = 0 : i64, scratch_operands = 0 : i64, tpu.core_type = #tpu.core_type<tc>} {
    %c0 = arith.constant 0 : index
    %c0_0 = arith.constant 0 : index
    %0 = vector.load %arg0[%c0, %c0_0] : memref<32x32xbf16, #tpu.memory_space<vmem>>, vector<32x32xbf16>
    %c0_1 = arith.constant 0 : index
    %c0_2 = arith.constant 0 : index
    %1 = vector.load %arg1[%c0_1, %c0_2] : memref<32x128xbf16, #tpu.memory_space<vmem>>, vector<32x128xbf16>
    %cst = arith.constant dense<0.000000e+00> : vector<32x128xf32>
    %2 = tpu.matmul %0, %1, %cst {dimension_numbers = #tpu.dot_dimension_numbers<[1], [0], [0], [1], [0, 0, 1, 1], [], []>} : vector<32x32xbf16>, vector<32x128xbf16>, vector<32x128xf32> -> vector<32x128xf32>
    %c0_3 = arith.constant 0 : index
    %c0_4 = arith.constant 0 : index
    %3 = vector.load %arg2[%c0_3, %c0_4] : memref<128x128xf32, #tpu.memory_space<vmem>>, vector<128x128xf32>
    %cst_5 = arith.constant dense<0.000000e+00> : vector<32x128xf32>
    %4 = tpu.matmul %2, %3, %cst_5 {dimension_numbers = #tpu.dot_dimension_numbers<[1], [0], [0], [1], [0, 0, 1, 1], [], []>} : vector<32x128xf32>, vector<128x128xf32>, vector<32x128xf32> -> vector<32x128xf32>
    %c0_6 = arith.constant 0 : index
    %c0_7 = arith.constant 0 : index
    %5 = vector.load %arg3[%c0_6, %c0_7] : memref<32x128xf32, #tpu.memory_space<vmem>>, vector<32x128xf32>
    %6 = arith.subf %4, %5 : vector<32x128xf32>
    %7 = arith.mulf %6, %6 : vector<32x128xf32>
    %cst_8 = arith.constant 9.99999997E-7 : f32
    %8 = vector.broadcast %cst_8 : f32 to vector<32x128xf32>
    %9 = arith.addf %7, %8 : vector<32x128xf32>
    %10 = math.rsqrt %9 : vector<32x128xf32>
    %11 = arith.mulf %9, %10 : vector<32x128xf32>
    %c0_9 = arith.constant 0 : index
    %c0_10 = arith.constant 0 : index
    %12 = vector.load %arg4[%c0_9, %c0_10] : memref<32x128xf32, #tpu.memory_space<vmem>>, vector<32x128xf32>
    %13 = arith.mulf %11, %12 : vector<32x128xf32>
    %14 = vector.shape_cast %13 : vector<32x128xf32> to vector<1x32x128xf32>
    %cst_11 = arith.constant dense<0.000000e+00> : vector<1xf32>
    %15 = vector.multi_reduction <add>, %14, %cst_11 [1, 2] : vector<1x32x128xf32> to vector<1xf32>
    %16 = vector.shape_cast %15 : vector<1xf32> to vector<1x1x1xf32>
    %17 = vector.extract %16[0, 0, 0] : f32 from vector<1x1x1xf32>
    %c0_12 = arith.constant 0 : index
    %c0_13 = arith.constant 0 : index
    %18 = memref.load %arg5[%c0_12, %c0_13] : memref<1x1xf32, #tpu.memory_space<smem>>
    memref.store %17, %arg5[%c0_12, %c0_13] : memref<1x1xf32, #tpu.memory_space<smem>>
    return
  }
}

</mosaic_0001>

<llo_original>
// kernel: _fused_pyramid_loss.1
$region0: #{_fused_pyramid_loss.1}
  #allocation0 [shape = 'u32[]', space=smem, size = 0x4, offset = 0x4, fixed_abs, tag = 'smem constant byte address 0x4 - core index']
  #allocation1 [shape = 'u32[72,128]{1,0:T(1,128)}', space=vmem, size = 0x9000, scoped, tag = 'internal scratch']
  %s0 = inlined_call_operand.vmem [shape: bf16[32,32], index: 0, kind: input, shape index: {}]
  %s1 = inlined_call_operand.vmem [shape: bf16[32,128], index: 1, kind: input, shape index: {}]
  %s2 = inlined_call_operand.vmem [shape: f32[128,128], index: 2, kind: input, shape index: {}]
  %s3 = inlined_call_operand.vmem [shape: f32[32,128], index: 3, kind: input, shape index: {}]
  %s4 = inlined_call_operand.vmem [shape: f32[32,128], index: 4, kind: input, shape index: {}]
  %s5 = inlined_call_operand.hbm [shape: f32[1,1], index: 5, kind: output, shape index: {}]
  %s6 = sld [smem:[#allocation0]]
  $region30: #{_fused_pyramid_loss.1} parent=0
    _
  %s8 = ssub.s32 1, %s6
  %s9 = scalar_select 0, %s8, %s6
  $region1: #{_fused_pyramid_loss.1} parent=0
    #allocation2 [shape = 'u8[512]{0}', space=smem, size = 0x200, scoped, tag = 'output window, operand 0, single buffered']
    #allocation3 [shape = 's32[1]{0}', space=sflag, size = 0x4, scoped, tag = 'scoped memory for _fused_pyramid_loss.1']
    %10 = vsyncpa [#allocation3], 0
    // Predicated region
    $region2: #{_fused_pyramid_loss.1} parent=1 // pred_check
      _
    $region3: #{_fused_pyramid_loss.1} parent=1 // pred_check_branch
      %12 = sbr.rel (0) target = $region5
    $region4: #{_fused_pyramid_loss.1} parent=1 // pred_region
      _
    $region5: #{_fused_pyramid_loss.1} parent=1 // pred_fallthru
      _
    // Predicated region
    $region6: #{_fused_pyramid_loss.1} parent=1 // pred_check
      _
    $region7: #{_fused_pyramid_loss.1} parent=1 // pred_check_branch
      %14 = sbr.rel (0) target = $region9
    $region8: #{_fused_pyramid_loss.1} parent=1 // pred_region
      _
    $region9: #{_fused_pyramid_loss.1} parent=1 // pred_fallthru
      _
    // Predicated region
    $region10: #{_fused_pyramid_loss.1} parent=1 // pred_check
      _
    $region11: #{_fused_pyramid_loss.1} parent=1 // pred_check_branch
      %16 = sbr.rel (0) target = $region13
    $region12: #{_fused_pyramid_loss.1} parent=1 // pred_region
      _
    $region13: #{_fused_pyramid_loss.1} parent=1 // pred_fallthru
      _
    // Predicated region
    $region14: #{_fused_pyramid_loss.1} parent=1 // pred_check
      _
    $region15: #{_fused_pyramid_loss.1} parent=1 // pred_check_branch
      %18 = sbr.rel (0) target = $region17
    $region16: #{_fused_pyramid_loss.1} parent=1 // pred_region
      _
    $region17: #{_fused_pyramid_loss.1} parent=1 // pred_fallthru
      _
    // Predicated region
    $region18: #{_fused_pyramid_loss.1} parent=1 // pred_check
      _
    $region19: #{_fused_pyramid_loss.1} parent=1 // pred_check_branch
      %20 = sbr.rel (0) target = $region21
    $region20: #{_fused_pyramid_loss.1} parent=1 // pred_region
      _
    $region21: #{_fused_pyramid_loss.1} parent=1 // pred_fallthru
      _
    %v22 = vld [vmem:[%s0] sm:$0xf]
    %v23 = vld [vmem:[%s0 + $0x4] sm:$0xf]
    %v24 = vld [vmem:[%s0 + $0x8] sm:$0xf]
    %v25 = vld [vmem:[%s0 + $0xc] sm:$0xf]
    %v26 = vld [vmem:[%s1] sm:$0xf]
    %v27 = vld [vmem:[%s1 + $0x4] sm:$0xf]
    %v28 = vld [vmem:[%s1 + $0x8] sm:$0xf]
    %v29 = vld [vmem:[%s1 + $0xc] sm:$0xf]
    %v34 = vunpack.c.l.b16 %v22
    %v35 = vunpack.c.l.b16 %v23
    %v36 = vunpack.c.l.b16 %v24
    %v37 = vunpack.c.l.b16 %v25
    %v38 = vpack.c.b16 %v35, %v34
    %v39 = vpack.c.b16 %v37, %v36
    %v44 = vunpack.c.l.b16 %v26
    %v45 = vunpack.c.l.b16 %v27
    %v46 = vunpack.c.l.b16 %v28
    %v47 = vunpack.c.l.b16 %v29
    %v48 = vpack.c.b16 %v45, %v44
    %v49 = vpack.c.b16 %v47, %v46
    %vm52 = vcmask 261120
    %v54 = vsel %vm52, %v38, 0
    %v57 = vsel %vm52, %v39, 0
    %59 = vmatpush.bf16.msra.mxu0 0
    %60 = vmatpush.bf16.msra.mxu0 0
    %61 = vmatpush.bf16.msra.mxu0 0
    %62 = vmatpush.bf16.msra.mxu0 0
    %63 = vmatpush.bf16.msra.mxu0 0
    %64 = vmatpush.bf16.msra.mxu0 0
    %65 = vmatpush.bf16.msra.mxu0 %v49
    %66 = vmatpush.bf16.msra.mxu0 %v48
    %67 = vmatmul.bf16.gmra.mxu0 %v54
    %v68 = vpop.f32.mrf.mxu0
    %v69 = vadd.f32 0.0, %v68
    %v70 = vpop.f32.mrf.mxu0
    %v71 = vadd.f32 0.0, %v70
    %72 = vmatmul.bf16.gmra.mxu0 %v57
    %v73 = vpop.f32.mrf.mxu0
    %v74 = vadd.f32 0.0, %v73
    %v75 = vpop.f32.mrf.mxu0
    %v76 = vadd.f32 0.0, %v75
    %77 = vdwg.mxu0
    %v78 = vld [vmem:[%s2] sm:$0xff]
    %v79 = vld [vmem:[%s2 + $0x8] sm:$0xff]
    %v80 = vld [vmem:[%s2 + $0x10] sm:$0xff]
    %v81 = vld [vmem:[%s2 + $0x18] sm:$0xff]
    %v82 = vld [vmem:[%s2 + $0x20] sm:$0xff]
    %v83 = vld [vmem:[%s2 + $0x28] sm:$0xff]
    %v84 = vld [vmem:[%s2 + $0x30] sm:$0xff]
    %v85 = vld [vmem:[%s2 + $0x38] sm:$0xff]
    %v86 = vld [vmem:[%s2 + $0x40] sm:$0xff]
    %v87 = vld [vmem:[%s2 + $0x48] sm:$0xff]
    %v88 = vld [vmem:[%s2 + $0x50] sm:$0xff]
    %v89 = vld [vmem:[%s2 + $0x58] sm:$0xff]
    %v90 = vld [vmem:[%s2 + $0x60] sm:$0xff]
    %v91 = vld [vmem:[%s2 + $0x68] sm:$0xff]
    %v92 = vld [vmem:[%s2 + $0x70] sm:$0xff]
    %v93 = vld [vmem:[%s2 + $0x78] sm:$0xff]
    %94 = vmatpush.msra.mxu0 %v93
    %95 = vmatpush.msra.mxu0 %v92
    %96 = vmatpush.msra.mxu0 %v91
    %97 = vmatpush.msra.mxu0 %v90
    %98 = vmatpush.msra.mxu0 %v89
    %99 = vmatpush.msra.mxu0 %v88
    %100 = vmatpush.msra.mxu0 %v87
    %101 = vmatpush.msra.mxu0 %v86
    %102 = vmatpush.msra.mxu0 %v85
    %103 = vmatpush.msra.mxu0 %v84
    %104 = vmatpush.msra.mxu0 %v83
    %105 = vmatpush.msra.mxu0 %v82
    %106 = vmatpush.msra.mxu0 %v81
    %107 = vmatpush.msra.mxu0 %v80
    %108 = vmatpush.msra.mxu0 %v79
    %109 = vmatpush.msra.mxu0 %v78
    %110 = vmatmul.f32.gmra.mxu0 %v69
    %v111 = vpop.f32.mrf.mxu0
    %v112 = vadd.f32 0.0, %v111
    %113 = vmatmul.f32.gmra.mxu0 %v71
    %v114 = vpop.f32.mrf.mxu0
    %v115 = vadd.f32 0.0, %v114
    %116 = vmatmul.f32.gmra.mxu0 %v74
    %v117 = vpop.f32.mrf.mxu0
    %v118 = vadd.f32 0.0, %v117
    %119 = vmatmul.f32.gmra.mxu0 %v76
    %v120 = vpop.f32.mrf.mxu0
    %v121 = vadd.f32 0.0, %v120
    %122 = vdwg.mxu0
    %v123 = vld [vmem:[%s3] sm:$0xff]
    %v124 = vld [vmem:[%s3 + $0x8] sm:$0xff]
    %v125 = vld [vmem:[%s3 + $0x10] sm:$0xff]
    %v126 = vld [vmem:[%s3 + $0x18] sm:$0xff]
    %v127 = vsub.f32 %v112, %v123
    %v128 = vsub.f32 %v115, %v124
    %v129 = vsub.f32 %v118, %v125
    %v130 = vsub.f32 %v121, %v126
    %v131 = vmul.f32 %v127, %v127
    %v132 = vmul.f32 %v128, %v128
    %v133 = vmul.f32 %v129, %v129
    %v134 = vmul.f32 %v130, %v130
    %v135 = vadd.f32 %v131, 1e-06
    %v136 = vadd.f32 %v132, 1e-06
    %v137 = vadd.f32 %v133, 1e-06
    %v138 = vadd.f32 %v134, 1e-06
    %v139 = vrsqrt.pop %v135
    %v140 = vmul.f32 %v139, %v135
    %v141 = vmul.f32 %v140, %v139
    %v142 = vmul.f32 0.5, %v141
    %v143 = vsub.f32 1.5, %v142
    %v144 = vmul.f32 %v139, %v143
    %vm145 = vweird.f32 %v135
    %vm146 = vweird.f32 %v139
    %vm147 = vmor %vm145, %vm146
    %v148 = vsel %vm147, %v139, %v144
    %v149 = vrsqrt.pop %v136
    %v150 = vmul.f32 %v149, %v136
    %v151 = vmul.f32 %v150, %v149
    %v152 = vmul.f32 0.5, %v151
    %v153 = vsub.f32 1.5, %v152
    %v154 = vmul.f32 %v149, %v153
    %vm155 = vweird.f32 %v136
    %vm156 = vweird.f32 %v149
    %vm157 = vmor %vm155, %vm156
    %v158 = vsel %vm157, %v149, %v154
    %v159 = vrsqrt.pop %v137
    %v160 = vmul.f32 %v159, %v137
    %v161 = vmul.f32 %v160, %v159
    %v162 = vmul.f32 0.5, %v161
    %v163 = vsub.f32 1.5, %v162
    %v164 = vmul.f32 %v159, %v163
    %vm165 = vweird.f32 %v137
    %vm166 = vweird.f32 %v159
    %vm167 = vmor %vm165, %vm166
    %v168 = vsel %vm167, %v159, %v164
    %v169 = vrsqrt.pop %v138
    %v170 = vmul.f32 %v169, %v138
    %v171 = vmul.f32 %v170, %v169
    %v172 = vmul.f32 0.5, %v171
    %v173 = vsub.f32 1.5, %v172
    %v174 = vmul.f32 %v169, %v173
    %vm175 = vweird.f32 %v138
    %vm176 = vweird.f32 %v169
    %vm177 = vmor %vm175, %vm176
    %v178 = vsel %vm177, %v169, %v174
    %v179 = vmul.f32 %v135, %v148
    %v180 = vmul.f32 %v136, %v158
    %v181 = vmul.f32 %v137, %v168
    %v182 = vmul.f32 %v138, %v178
    %v183 = vld [vmem:[%s4] sm:$0xff]
    %v184 = vld [vmem:[%s4 + $0x8] sm:$0xff]
    %v185 = vld [vmem:[%s4 + $0x10] sm:$0xff]
    %v186 = vld [vmem:[%s4 + $0x18] sm:$0xff]
    %v187 = vmul.f32 %v179, %v183
    %v188 = vmul.f32 %v180, %v184
    %v189 = vmul.f32 %v181, %v185
    %v190 = vmul.f32 %v182, %v186
    %v191 = vadd.f32 %v187, %v188
    %v192 = vadd.f32 %v191, %v189
    %v193 = vadd.f32 %v192, %v190
    %194 = vadd.xlane.f32.xlu0 %v193
    %v195 = vpop.xlane.xlu0 %194
    %v196 = vrot.slane %v195, 4
    %v197 = vadd.f32 %v195, %v196
    %v198 = vrot.slane %v197, 2
    %v199 = vadd.f32 %v197, %v198
    %v200 = vrot.slane %v199, 1
    %v201 = vadd.f32 %v199, %v200
    %s202 = vtos %v201
    %s203 = scalar_lea.smem [#allocation2], 0
    %204 = sst [smem:[%s203]] %s202
    // Predicated region
    $region22: #{_fused_pyramid_loss.1} parent=1 // pred_check
      _
    $region23: #{_fused_pyramid_loss.1} parent=1 // pred_check_branch
      %206 = sbr.rel (0) target = $region25
    $region24: #{_fused_pyramid_loss.1} parent=1 // pred_region
      %208 = vsyncadd [#allocation3], 0
      %s210 = sshll.u32 %s5, 4
      %s211 = int_to_ptr.hbm [resolvable:$true] %s210
      %213 = dma.smem_to_hbm [#allocation2], 16, %s211, [#allocation3]
    $region25: #{_fused_pyramid_loss.1} parent=1 // pred_fallthru
      _
    // Predicated region
    $region26: #{_fused_pyramid_loss.1} parent=1 // pred_check
      _
    $region27: #{_fused_pyramid_loss.1} parent=1 // pred_check_branch
      %215 = sbr.rel (0) target = $region29
    $region28: #{_fused_pyramid_loss.1} parent=1 // pred_region
      %217 = dma.done [#allocation3], 16
    $region29: #{_fused_pyramid_loss.1} parent=1 // pred_fallthru
      _
    %218 = sfence
    %219 = vsyncpa [#allocation3], 1

</llo_original>
